<compile_context>
chip_gen: v7x
topology: tpu7x:2x2x1
jax: 0.10.0
libtpu: 0.0.40
codegen_flags: <defaults>
</compile_context>

<pallas_src>
import functools

import jax
import jax.numpy as jnp
from jax.experimental import pallas as pl
from jax.experimental.pallas import tpu as pltpu


def _recip(x):
    # EUP reciprocal (frees the VALU slot) + one Newton step to recover ~f32
    # accuracy (approx alone is ~2^-12 relative error).
    y = pl.reciprocal(x, approx=True)
    return y * (2.0 - x * y)


def _giou_kernel(n_ref, x_ref, out_ref, *, eps, tile_groups):
    # n_ref:  SMEM (1,) int32                    -- number of valid boxes
    # x_ref:  VMEM (8, tile_groups, 8, 128) f32  -- this tile's packed coords
    # out_ref: VMEM (1, 128) f32                 -- lane-dense per-tile partial
    i = pl.program_id(0)
    # Valid-count remaining at the start of this tile (scalar, SMEM read).
    base = n_ref[0] - i * (tile_groups * 1024)

    # Flat index of an element within one (8, 128) group (hoisted constant).
    row = jax.lax.broadcasted_iota(jnp.int32, (8, 128), 0)
    col = jax.lax.broadcasted_iota(jnp.int32, (8, 128), 1)
    within = row * 128 + col  # 0..1023

    def body(g, acc):
        px1 = x_ref[0, g]
        py1 = x_ref[1, g]
        px2 = x_ref[2, g]
        py2 = x_ref[3, g]
        tx1 = x_ref[4, g]
        ty1 = x_ref[5, g]
        tx2 = x_ref[6, g]
        ty2 = x_ref[7, g]

        # intersection
        w = jnp.maximum(jnp.minimum(px2, tx2) - jnp.maximum(px1, tx1), 0.0)
        h = jnp.maximum(jnp.minimum(py2, ty2) - jnp.maximum(py1, ty1), 0.0)
        overlap = w * h

        # areas & union
        ap = (px2 - px1) * (py2 - py1)
        ag = (tx2 - tx1) * (ty2 - ty1)
        union = ap + ag - overlap + eps
        ious = overlap * _recip(union)

        # smallest enclosing box
        ew = jnp.maximum(jnp.maximum(px2, tx2) - jnp.minimum(px1, tx1), 0.0)
        eh = jnp.maximum(jnp.maximum(py2, ty2) - jnp.minimum(py1, ty1), 0.0)
        enclose_area = ew * eh + eps

        # loss = 1 - gious = 1 - ious + (enclose - union)/enclose
        #      = 2 - ious - union/enclose
        loss = 2.0 - ious - union * _recip(enclose_area)  # (8, 128)

        # Mask padded lanes (only the tail of the last tile has thr < 1024;
        # everywhere else the compare is all-true and costs 2 VALU ops).
        thr = base - g * 1024
        return acc + jnp.where(within < thr, loss, 0.0)

    acc = jax.lax.fori_loop(
        0, tile_groups, body, jnp.zeros((8, 128), jnp.float32),
        unroll=min(8, tile_groups))

    # Free XLU sublane reduce -> lane-dense (1, 128) partial.
    out_ref[...] = acc.sum(axis=0, keepdims=True)


def _giou_loss_ref(pred, target, eps=1e-6):
    # Pure-JAX reference mirroring the PyTorch giou_loss() exactly.
    lt = jnp.maximum(pred[:, :2], target[:, :2])
    rb = jnp.minimum(pred[:, 2:], target[:, 2:])
    wh = jnp.maximum(rb - lt, 0.0)
    overlap = wh[:, 0] * wh[:, 1]
    ap = (pred[:, 2] - pred[:, 0]) * (pred[:, 3] - pred[:, 1])
    ag = (target[:, 2] - target[:, 0]) * (target[:, 3] - target[:, 1])
    union = ap + ag - overlap + eps
    ious = overlap / union
    ex1y1 = jnp.minimum(pred[:, :2], target[:, :2])
    ex2y2 = jnp.maximum(pred[:, 2:], target[:, 2:])
    ewh = jnp.maximum(ex2y2 - ex1y1, 0.0)
    enclose_area = ewh[:, 0] * ewh[:, 1] + eps
    gious = ious - (enclose_area - union) / enclose_area
    return 1.0 - gious


def _pow2_floor(x):
    return 1 << (x.bit_length() - 1)


def giou_loss_pallas(pred, target, *, eps=1e-6, loss_weight=1.0, weight=None,
                     force_pallas=False, pallas_min_n=65536):
    """Equivalent of GIoULoss(eps, 'mean', loss_weight).forward(pred, target, weight)."""
    assert pred.shape == target.shape and pred.shape[-1] == 4
    n = pred.shape[0]

    predf = pred.astype(jnp.float32)
    targetf = target.astype(jnp.float32)

    if n == 0 or (n < pallas_min_n and not force_pallas):
        # Small-n fast path: launch + pack overhead would dominate the kernel.
        loss = loss_weight * jnp.mean(_giou_loss_ref(predf, targetf, eps))
    else:
        # --- tiling: groups of 1024 boxes (one (8,128) f32 vreg per coord) ---
        groups_total = -(-n // 1024)
        if groups_total >= 2:
            # Up to 64 groups per tile (2 MiB block), but keep >= 2 grid steps
            # so both v7x TensorCores get work on the "parallel" axis.
            tile_groups = min(64, _pow2_floor(groups_total // 2))
        else:
            tile_groups = 1
        num_tiles = -(-groups_total // tile_groups)
        groups_pad = num_tiles * tile_groups
        n_pad = groups_pad * 1024

        # --- pack coordinate-major (single fuseable pass; see TODO above) ---
        slab = jnp.concatenate([predf.T, targetf.T], axis=0)        # (8, n)
        slab = jnp.pad(slab, ((0, 0), (0, n_pad - n)))
        slab = slab.reshape(8, groups_pad, 8, 128)
        n_arr = jnp.array([n], dtype=jnp.int32)

        partials = pl.pallas_call(
            functools.partial(_giou_kernel, eps=eps, tile_groups=tile_groups),
            out_shape=jax.ShapeDtypeStruct((1, num_tiles * 128), jnp.float32),
            grid_spec=pltpu.PrefetchScalarGridSpec(
                num_scalar_prefetch=1,
                grid=(num_tiles,),
                in_specs=[
                    pl.BlockSpec((8, tile_groups, 8, 128),
                                 lambda i, n_ref: (0, i, 0, 0)),
                ],
                out_specs=pl.BlockSpec((1, 128), lambda i, n_ref: (0, i)),
            ),
            compiler_params=pltpu.CompilerParams(
                dimension_semantics=("parallel",),
                # ~4 MiB double-buffered input at the largest tile; set the
                # scoped limit explicitly so v5e's 16 MiB default (and any
                # future block growth) is never a surprise.
                vmem_limit_bytes=32 * 1024 * 1024,
            ),
            cost_estimate=pl.CostEstimate(
                flops=30 * n_pad,
                transcendentals=2 * n_pad,
                bytes_accessed=32 * n_pad + 4 * num_tiles * 128,
            ),
        )(n_arr, slab)

        total = jnp.sum(partials)                # tiny (1, num_tiles*128) reduce
        loss = loss_weight * total / n           # 'mean' reduction

    if weight is not None:
        # forward(): if no positive weight, return (pred * 0).sum(); otherwise
        # this module's forward ignores weight.
        # TODO(synk): full mmdet-style per-box weighting / avg_factor is not
        # part of this module's forward() and is not implemented here.
        fallback = (pred * 0.0).sum().astype(jnp.float32)
        loss = jnp.where(jnp.any(weight > 0), loss, fallback)
    return loss


if __name__ == "__main__":
    eps = 1e-6
    loss_weight = 1.0

    def make_boxes(ka, kb, n):
        # Deterministic boxes in (x1, y1, x2, y2) format with x2 > x1, y2 > y1.
        xy = jax.random.uniform(ka, (n, 2), jnp.float32, 0.0, 10.0)
        wh = jax.random.uniform(kb, (n, 2), jnp.float32, 0.5, 5.0)
        return jnp.concatenate([xy, xy + wh], axis=1)

    # Case 1: small n=8 -- one tile, heavy lane padding + mask.
    k1, k2, k3, k4 = jax.random.split(jax.random.PRNGKey(0), 4)
    pred = make_boxes(k1, k2, 8)
    target = make_boxes(k3, k4, 8)
    out = giou_loss_pallas(pred, target, eps=eps, loss_weight=loss_weight,
                           force_pallas=True)
    out = jax.block_until_ready(out)
    ref = loss_weight * _giou_loss_ref(pred, target, eps).mean()
    assert jnp.allclose(out, ref, rtol=1e-5, atol=1e-6), (out, ref)

    # Case 2: n=1500 -- multiple grid tiles, in-kernel group loop, tail mask.
    k5, k6, k7, k8 = jax.random.split(jax.random.PRNGKey(1), 4)
    pred2 = make_boxes(k5, k6, 1500)
    target2 = make_boxes(k7, k8, 1500)
    out2 = giou_loss_pallas(pred2, target2, eps=eps, loss_weight=loss_weight,
                            force_pallas=True)
    out2 = jax.block_until_ready(out2)
    ref2 = loss_weight * _giou_loss_ref(pred2, target2, eps).mean()
    assert jnp.allclose(out2, ref2, rtol=1e-5, atol=1e-6), (out2, ref2)

    print("KERNEL_OK")
</pallas_src>

<mosaic_0001>
module attributes {stable_mosaic.version = 11 : i64} {
  func.func @_giou_kernel(%arg0: i32, %arg1: memref<1xi32, #tpu.memory_space<smem>>, %arg2: memref<8x1x8x128xf32, #tpu.memory_space<vmem>>, %arg3: memref<1x128xf32, #tpu.memory_space<vmem>>) attributes {dimension_semantics = [#tpu.dimension_semantics<parallel>], iteration_bounds = array<i64: 1>, scalar_prefetch = 1 : i64, scratch_operands = 0 : i64, tpu.core_type = #tpu.core_type<tc>, window_params = [{transform_indices = @transform_0, window_bounds = array<i64: 8, 1, 8, 128>}, {transform_indices = @transform_1, window_bounds = array<i64: 1, 128>}]} {
    %c0 = arith.constant 0 : index
    %0 = memref.load %arg1[%c0] : memref<1xi32, #tpu.memory_space<smem>>
    %c1024_i32 = arith.constant 1024 : i32
    %1 = arith.muli %arg0, %c1024_i32 : i32
    %2 = arith.subi %0, %1 : i32
    %3 = tpu.iota {dimensions = array<i32: 0>} : vector<8x128xi32>
    %4 = tpu.iota {dimensions = array<i32: 1>} : vector<8x128xi32>
    %c128_i32 = arith.constant 128 : i32
    %5 = vector.broadcast %c128_i32 : i32 to vector<8x128xi32>
    %6 = arith.muli %3, %5 : vector<8x128xi32>
    %7 = arith.addi %6, %4 : vector<8x128xi32>
    %cst = arith.constant 0.000000e+00 : f32
    %8 = vector.broadcast %cst : f32 to vector<8x128xf32>
    %c0_i32 = arith.constant 0 : i32
    %c0_0 = arith.constant 0 : index
    %9 = arith.index_cast %c0_i32 : i32 to index
    %c0_1 = arith.constant 0 : index
    %c0_2 = arith.constant 0 : index
    %10 = vector.load %arg2[%c0_0, %9, %c0_1, %c0_2] : memref<8x1x8x128xf32, #tpu.memory_space<vmem>>, vector<1x1x8x128xf32>
    %11 = vector.shape_cast %10 : vector<1x1x8x128xf32> to vector<8x128xf32>
    %c1 = arith.constant 1 : index
    %12 = arith.index_cast %c0_i32 : i32 to index
    %c0_3 = arith.constant 0 : index
    %c0_4 = arith.constant 0 : index
    %13 = vector.load %arg2[%c1, %12, %c0_3, %c0_4] : memref<8x1x8x128xf32, #tpu.memory_space<vmem>>, vector<1x1x8x128xf32>
    %14 = vector.shape_cast %13 : vector<1x1x8x128xf32> to vector<8x128xf32>
    %c2 = arith.constant 2 : index
    %15 = arith.index_cast %c0_i32 : i32 to index
    %c0_5 = arith.constant 0 : index
    %c0_6 = arith.constant 0 : index
    %16 = vector.load %arg2[%c2, %15, %c0_5, %c0_6] : memref<8x1x8x128xf32, #tpu.memory_space<vmem>>, vector<1x1x8x128xf32>
    %17 = vector.shape_cast %16 : vector<1x1x8x128xf32> to vector<8x128xf32>
    %c3 = arith.constant 3 : index
    %18 = arith.index_cast %c0_i32 : i32 to index
    %c0_7 = arith.constant 0 : index
    %c0_8 = arith.constant 0 : index
    %19 = vector.load %arg2[%c3, %18, %c0_7, %c0_8] : memref<8x1x8x128xf32, #tpu.memory_space<vmem>>, vector<1x1x8x128xf32>
    %20 = vector.shape_cast %19 : vector<1x1x8x128xf32> to vector<8x128xf32>
    %c4 = arith.constant 4 : index
    %21 = arith.index_cast %c0_i32 : i32 to index
    %c0_9 = arith.constant 0 : index
    %c0_10 = arith.constant 0 : index
    %22 = vector.load %arg2[%c4, %21, %c0_9, %c0_10] : memref<8x1x8x128xf32, #tpu.memory_space<vmem>>, vector<1x1x8x128xf32>
    %23 = vector.shape_cast %22 : vector<1x1x8x128xf32> to vector<8x128xf32>
    %c5 = arith.constant 5 : index
    %24 = arith.index_cast %c0_i32 : i32 to index
    %c0_11 = arith.constant 0 : index
    %c0_12 = arith.constant 0 : index
    %25 = vector.load %arg2[%c5, %24, %c0_11, %c0_12] : memref<8x1x8x128xf32, #tpu.memory_space<vmem>>, vector<1x1x8x128xf32>
    %26 = vector.shape_cast %25 : vector<1x1x8x128xf32> to vector<8x128xf32>
    %c6 = arith.constant 6 : index
    %27 = arith.index_cast %c0_i32 : i32 to index
    %c0_13 = arith.constant 0 : index
    %c0_14 = arith.constant 0 : index
    %28 = vector.load %arg2[%c6, %27, %c0_13, %c0_14] : memref<8x1x8x128xf32, #tpu.memory_space<vmem>>, vector<1x1x8x128xf32>
    %29 = vector.shape_cast %28 : vector<1x1x8x128xf32> to vector<8x128xf32>
    %c7 = arith.constant 7 : index
    %30 = arith.index_cast %c0_i32 : i32 to index
    %c0_15 = arith.constant 0 : index
    %c0_16 = arith.constant 0 : index
    %31 = vector.load %arg2[%c7, %30, %c0_15, %c0_16] : memref<8x1x8x128xf32, #tpu.memory_space<vmem>>, vector<1x1x8x128xf32>
    %32 = vector.shape_cast %31 : vector<1x1x8x128xf32> to vector<8x128xf32>
    %33 = arith.minimumf %17, %29 : vector<8x128xf32>
    %34 = arith.maximumf %11, %23 : vector<8x128xf32>
    %35 = arith.subf %33, %34 : vector<8x128xf32>
    %cst_17 = arith.constant 0.000000e+00 : f32
    %36 = vector.broadcast %cst_17 : f32 to vector<8x128xf32>
    %37 = arith.maximumf %35, %36 : vector<8x128xf32>
    %38 = arith.minimumf %20, %32 : vector<8x128xf32>
    %39 = arith.maximumf %14, %26 : vector<8x128xf32>
    %40 = arith.subf %38, %39 : vector<8x128xf32>
    %cst_18 = arith.constant 0.000000e+00 : f32
    %41 = vector.broadcast %cst_18 : f32 to vector<8x128xf32>
    %42 = arith.maximumf %40, %41 : vector<8x128xf32>
    %43 = arith.mulf %37, %42 : vector<8x128xf32>
    %44 = arith.subf %17, %11 : vector<8x128xf32>
    %45 = arith.subf %20, %14 : vector<8x128xf32>
    %46 = arith.mulf %44, %45 : vector<8x128xf32>
    %47 = arith.subf %29, %23 : vector<8x128xf32>
    %48 = arith.subf %32, %26 : vector<8x128xf32>
    %49 = arith.mulf %47, %48 : vector<8x128xf32>
    %50 = arith.addf %46, %49 : vector<8x128xf32>
    %51 = arith.subf %50, %43 : vector<8x128xf32>
    %cst_19 = arith.constant 9.99999997E-7 : f32
    %52 = vector.broadcast %cst_19 : f32 to vector<8x128xf32>
    %53 = arith.addf %51, %52 : vector<8x128xf32>
    %54 = tpu.reciprocal %53 {approx = true} : vector<8x128xf32> -> vector<8x128xf32>
    %55 = arith.mulf %53, %54 : vector<8x128xf32>
    %cst_20 = arith.constant 2.000000e+00 : f32
    %56 = vector.broadcast %cst_20 : f32 to vector<8x128xf32>
    %57 = arith.subf %56, %55 : vector<8x128xf32>
    %58 = arith.mulf %54, %57 : vector<8x128xf32>
    %59 = arith.mulf %43, %58 : vector<8x128xf32>
    %60 = arith.maximumf %17, %29 : vector<8x128xf32>
    %61 = arith.minimumf %11, %23 : vector<8x128xf32>
    %62 = arith.subf %60, %61 : vector<8x128xf32>
    %cst_21 = arith.constant 0.000000e+00 : f32
    %63 = vector.broadcast %cst_21 : f32 to vector<8x128xf32>
    %64 = arith.maximumf %62, %63 : vector<8x128xf32>
    %65 = arith.maximumf %20, %32 : vector<8x128xf32>
    %66 = arith.minimumf %14, %26 : vector<8x128xf32>
    %67 = arith.subf %65, %66 : vector<8x128xf32>
    %cst_22 = arith.constant 0.000000e+00 : f32
    %68 = vector.broadcast %cst_22 : f32 to vector<8x128xf32>
    %69 = arith.maximumf %67, %68 : vector<8x128xf32>
    %70 = arith.mulf %64, %69 : vector<8x128xf32>
    %cst_23 = arith.constant 9.99999997E-7 : f32
    %71 = vector.broadcast %cst_23 : f32 to vector<8x128xf32>
    %72 = arith.addf %70, %71 : vector<8x128xf32>
    %cst_24 = arith.constant 2.000000e+00 : f32
    %73 = vector.broadcast %cst_24 : f32 to vector<8x128xf32>
    %74 = arith.subf %73, %59 : vector<8x128xf32>
    %75 = tpu.reciprocal %72 {approx = true} : vector<8x128xf32> -> vector<8x128xf32>
    %76 = arith.mulf %72, %75 : vector<8x128xf32>
    %cst_25 = arith.constant 2.000000e+00 : f32
    %77 = vector.broadcast %cst_25 : f32 to vector<8x128xf32>
    %78 = arith.subf %77, %76 : vector<8x128xf32>
    %79 = arith.mulf %75, %78 : vector<8x128xf32>
    %80 = arith.mulf %53, %79 : vector<8x128xf32>
    %81 = arith.subf %74, %80 : vector<8x128xf32>
    %c1024_i32_26 = arith.constant 1024 : i32
    %82 = arith.muli %c0_i32, %c1024_i32_26 : i32
    %83 = arith.subi %2, %82 : i32
    %84 = vector.broadcast %83 : i32 to vector<8x128xi32>
    %85 = arith.cmpi slt, %7, %84 : vector<8x128xi32>
    %cst_27 = arith.constant 0.000000e+00 : f32
    %86 = vector.broadcast %cst_27 : f32 to vector<8x128xf32>
    %87 = arith.select %85, %81, %86 : vector<8x128xi1>, vector<8x128xf32>
    %88 = arith.addf %8, %87 : vector<8x128xf32>
    %c1_i32 = arith.constant 1 : i32
    %cst_28 = arith.constant dense<0.000000e+00> : vector<128xf32>
    %89 = vector.multi_reduction <add>, %88, %cst_28 [0] : vector<8x128xf32> to vector<128xf32>
    %90 = vector.shape_cast %89 : vector<128xf32> to vector<1x128xf32>
    %c0_29 = arith.constant 0 : index
    %c0_30 = arith.constant 0 : index
    %91 = vector.load %arg3[%c0_29, %c0_30] : memref<1x128xf32, #tpu.memory_space<vmem>>, vector<1x128xf32>
    tpu.vector_store %arg3[%c0_29, %c0_30], %90 {strides = array<i32>} : memref<1x128xf32, #tpu.memory_space<vmem>>, vector<1x128xf32>,
    return
  }
  func.func @transform_0(%arg0: i32, %arg1: memref<1xi32, #tpu.memory_space<smem>>) -> (i32, i32, i32, i32) {
    %c0_i32 = arith.constant 0 : i32
    %c0_i32_0 = arith.constant 0 : i32
    %c0_i32_1 = arith.constant 0 : i32
    %c0_i32_2 = arith.constant 0 : i32
    return %c0_i32, %arg0, %c0_i32_0, %c0_i32_1 : i32, i32, i32, i32
  }
  func.func @transform_1(%arg0: i32, %arg1: memref<1xi32, #tpu.memory_space<smem>>) -> (i32, i32) {
    %c0_i32 = arith.constant 0 : i32
    %c0_i32_0 = arith.constant 0 : i32
    return %c0_i32, %arg0 : i32, i32
  }
}

</mosaic_0001>

<llo_original>
// kernel: tpu_custom_call.1
$region0: #{tpu_custom_call.1}
  #allocation0 [shape = 'u32[]', space=smem, size = 0x4, offset = 0x4, fixed_abs, tag = 'smem constant byte address 0x4 - core index']
  #allocation1 [shape = 'u32[144,128]{1,0:T(1,128)}', space=vmem, size = 0x12000, scoped, tag = 'internal scratch']
  #allocation2 [shape = 's32[1]{0}', space=sflag, size = 0x4, scoped, tag = 'scoped memory for tpu_custom_call.1']
  #allocation3 [shape = 's32[1]{0:T(128)S(6)}', space=smem, size = 0x200, scoped, tag = 'prefetched SMEM operand 0']
  %s0 = inlined_call_operand.<no memory space> [shape: s32[1], index: 0, kind: input, shape index: {}]
  %s1 = inlined_call_operand.hbm [shape: f32[8,1,8,128], index: 1, kind: input, shape index: {}]
  %s2 = inlined_call_operand.hbm [shape: f32[1,128], index: 2, kind: output, shape index: {}]
  %s3 = sld [smem:[#allocation0]]
  $region18: #{tpu_custom_call.1} parent=0
    _
  %s5 = ssub.s32 1, %s3
  %s6 = scalar_select 0, %s5, %s3
  %7 = sst [smem:[#allocation3]] %s0
  $region1: #{tpu_custom_call.1} parent=0
    #allocation4 [shape = 'u8[32768]{0}', space=vmem, size = 0x8000, scoped, tag = 'input window, operand 1, single buffered']
    #allocation5 [shape = 's32[1]{0}', space=sflag, size = 0x4, scoped, tag = 'scoped memory for tpu_custom_call.1']
    #allocation6 [shape = 's32[1]{0}', space=sflag, size = 0x4, scoped, tag = 'scoped memory for tpu_custom_call.1']
    #allocation7 [shape = 'u8[512]{0}', space=vmem, size = 0x400, scoped, tag = 'output window, operand 0, single buffered']
    %8 = vsyncpa [#allocation5], 0
    %9 = vsyncpa [#allocation6], 0
    // Predicated region
    $region2: #{tpu_custom_call.1} parent=1 // pred_check
      _
    $region3: #{tpu_custom_call.1} parent=1 // pred_check_branch
      %11 = sbr.rel (0) target = $region5
    $region4: #{tpu_custom_call.1} parent=1 // pred_region
      %s13 = ssub.s32 1024, 1024
      %14 = vsyncadd [#allocation5], %s13
      %s15 = sshll.u32 [#allocation4], 4
      %s16 = int_to_ptr.vmem [resolvable:$true] %s15
      %21 = dma.hbm_to_vmem [thread:$0]  %s1, 1024, %s16, [#allocation5], 128, 128, 8
    $region5: #{tpu_custom_call.1} parent=1 // pred_fallthru
      _
    // Predicated region
    $region6: #{tpu_custom_call.1} parent=1 // pred_check
      _
    $region7: #{tpu_custom_call.1} parent=1 // pred_check_branch
      %23 = sbr.rel (0) target = $region9
    $region8: #{tpu_custom_call.1} parent=1 // pred_region
      %24 = dma.done [#allocation5], 1024
    $region9: #{tpu_custom_call.1} parent=1 // pred_fallthru
      _
    %s25 = sld [smem:[#allocation3]]
    %s26 = smul.u32 0, 1024
    %s27 = ssub.s32 %s25, %s26
    %v28 = vlaneseq
    %v29 = vshrl.u32 %v28, 7
    %v30 = vlaneseq
    %v31 = vand.u32 %v30, 127
    %v32 = vmul.u32 %v29, 128
    %v33 = vadd.s32 %v32, %v31
    %v34 = vld [vmem:[#allocation4] sm:$0xff]
    %s35 = scalar_lea.vmem [#allocation4], 8
    %v36 = vld [vmem:[%s35] sm:$0xff]
    %s37 = scalar_lea.vmem [#allocation4], 16
    %v38 = vld [vmem:[%s37] sm:$0xff]
    %s39 = scalar_lea.vmem [#allocation4], 24
    %v40 = vld [vmem:[%s39] sm:$0xff]
    %s41 = scalar_lea.vmem [#allocation4], 32
    %v42 = vld [vmem:[%s41] sm:$0xff]
    %s43 = scalar_lea.vmem [#allocation4], 40
    %v44 = vld [vmem:[%s43] sm:$0xff]
    %s45 = scalar_lea.vmem [#allocation4], 48
    %v46 = vld [vmem:[%s45] sm:$0xff]
    %s47 = scalar_lea.vmem [#allocation4], 56
    %v48 = vld [vmem:[%s47] sm:$0xff]
    %v49 = vmin.f32 %v38, %v46
    %v50 = vmax.f32 %v34, %v42
    %v51 = vsub.f32 %v49, %v50
    %v52 = vmax.f32 %v51, 0.0
    %v53 = vmin.f32 %v40, %v48
    %v54 = vmax.f32 %v36, %v44
    %v55 = vsub.f32 %v53, %v54
    %v56 = vmax.f32 %v55, 0.0
    %v57 = vmul.f32 %v52, %v56
    %v58 = vsub.f32 %v38, %v34
    %v59 = vsub.f32 %v40, %v36
    %v60 = vmul.f32 %v58, %v59
    %v61 = vsub.f32 %v46, %v42
    %v62 = vsub.f32 %v48, %v44
    %v63 = vmul.f32 %v61, %v62
    %v64 = vadd.f32 %v60, %v63
    %v65 = vsub.f32 %v64, %v57
    %v66 = vadd.f32 %v65, 1e-06
    %v67 = vrcp.pop %v66
    %v68 = vmul.f32 %v66, %v67
    %v69 = vsub.f32 2.0, %v68
    %v70 = vmul.f32 %v67, %v69
    %v71 = vmul.f32 %v57, %v70
    %v72 = vmax.f32 %v38, %v46
    %v73 = vmin.f32 %v34, %v42
    %v74 = vsub.f32 %v72, %v73
    %v75 = vmax.f32 %v74, 0.0
    %v76 = vmax.f32 %v40, %v48
    %v77 = vmin.f32 %v36, %v44
    %v78 = vsub.f32 %v76, %v77
    %v79 = vmax.f32 %v78, 0.0
    %v80 = vmul.f32 %v75, %v79
    %v81 = vadd.f32 %v80, 1e-06
    %v82 = vsub.f32 2.0, %v71
    %v83 = vrcp.pop %v81
    %v84 = vmul.f32 %v81, %v83
    %v85 = vsub.f32 2.0, %v84
    %v86 = vmul.f32 %v83, %v85
    %v87 = vmul.f32 %v66, %v86
    %v88 = vsub.f32 %v82, %v87
    %v89 = vstv %s27
    %vm90 = vcmp.lt.s32.totalorder %v33, %v89
    %v91 = vsel %vm90, %v88, 0.0
    %v92 = vadd.f32 %v91, 0.0
    %v93 = vrot.slane %v92, 4
    %v94 = vadd.f32 %v92, %v93
    %v95 = vrot.slane %v94, 2
    %v96 = vadd.f32 %v94, %v95
    %v97 = vrot.slane %v96, 1
    %v98 = vadd.f32 %v96, %v97
    %99 = vst [vmem:[#allocation7] sm:$0x1] %v98
    // Predicated region
    $region10: #{tpu_custom_call.1} parent=1 // pred_check
      _
    $region11: #{tpu_custom_call.1} parent=1 // pred_check_branch
      %101 = sbr.rel (0) target = $region13
    $region12: #{tpu_custom_call.1} parent=1 // pred_region
      %s103 = ssub.s32 16, 16
      %104 = vsyncadd [#allocation6], %s103
      %s106 = sshll.u32 [#allocation7], 4
      %s107 = int_to_ptr.vmem [resolvable:$true] %s106
      %109 = dma.vmem_to_hbm [thread:$0]  %s107, 16, %s2, [#allocation6]
    $region13: #{tpu_custom_call.1} parent=1 // pred_fallthru
      _
    // Predicated region
    $region14: #{tpu_custom_call.1} parent=1 // pred_check
      _
    $region15: #{tpu_custom_call.1} parent=1 // pred_check_branch
      %111 = sbr.rel (0) target = $region17
    $region16: #{tpu_custom_call.1} parent=1 // pred_region
      %112 = dma.done [#allocation6], 16
    $region17: #{tpu_custom_call.1} parent=1 // pred_fallthru
      _
    %113 = vsyncpa [#allocation5], 1
    %114 = vsyncpa [#allocation6], 1

</llo_original>
